<compile_context>
chip_gen: v7x
topology: tpu7x:2x2x1
jax: 0.10.0
libtpu: 0.0.40
codegen_flags: <defaults>
</compile_context>

<pallas_src>
import math

import jax
import jax.numpy as jnp
from jax.experimental import pallas as pl
from jax.experimental.pallas import tpu as pltpu


def _round_up(x, m):
    return ((x + m - 1) // m) * m


def ffn_kernel(xp_ref, w1b_ref, b1b_ref, w2b_ref, b2_ref, o_ref):
    # xp_ref : (TMp, P*F)  packed input rows (lane-dense)
    # w1b_ref: (P*F, P*H)  kron(I_P, W1^T)  block-diagonal
    # b1b_ref: (1,   P*H)  layer-1 bias tiled P times
    # w2b_ref: (P*H, P)    kron(I_P, w2 column) block-diagonal
    # b2_ref : (1, 1)      layer-2 bias scalar (SMEM)
    # o_ref  : (TMp, P)    packed output rows
    h = jnp.dot(xp_ref[...], w1b_ref[...], preferred_element_type=jnp.float32)
    h = jnp.maximum(h + b1b_ref[...], 0.0)           # bias + ReLU (VPU)
    # Dropout (eval mode) == identity.
    y = jnp.dot(h, w2b_ref[...], preferred_element_type=jnp.float32) + b2_ref[0, 0]
    o_ref[...] = y.astype(o_ref.dtype)


def feed_forward_network(x, w1, b1, w2, b2, *, tile_rows=32768):
    """x: [..., freq_len] -> [..., 1]   (PyTorch nn.Linear layout weights)."""
    orig_shape = x.shape
    F = orig_shape[-1]
    H = w1.shape[0]

    # Pack factor: as many rows as fit in one 128-lane vector row (8 for F=16).
    P = 128 // F if (F <= 128 and 128 % F == 0) else 1
    lanes = P * F

    x2d = x.reshape(-1, F)
    M = x2d.shape[0]

    m_pack = _round_up(M, P)
    if m_pack != M:
        # Rare ragged case: one extra copy of x. Zero rows give junk outputs
        # that are sliced off below.
        x2d = jnp.pad(x2d, ((0, m_pack - M), (0, 0)))
    mp = m_pack // P
    x_packed = x2d.reshape(mp, lanes)        # free reshape when no pad needed

    # Tiny block-diagonal packed weights (built trace-side, ~130 KiB total).
    eye = jnp.eye(P, dtype=w1.dtype)
    w1_big = jnp.kron(eye, w1.T)                       # (P*F, P*H)
    b1_big = jnp.tile(b1.reshape(1, H), (1, P))        # (1,   P*H)
    w2_big = jnp.kron(eye, w2.reshape(H, 1))           # (P*H, P)
    b2_s = b2.reshape(1, 1)

    # Row-tile selection: big tiles to amortize per-grid-step overhead,
    # split evenly (even tile count when >1 so both v7x TensorCores get work).
    target_mp = max(8, _round_up(int(tile_rows), P) // P)
    if mp <= target_mp:
        tile_mp = mp
    else:
        n_tiles = pl.cdiv(mp, target_mp)
        if n_tiles % 2:
            n_tiles += 1
        tile_mp = _round_up(pl.cdiv(mp, n_tiles), 8)
    grid = (pl.cdiv(mp, tile_mp),)

    out = pl.pallas_call(
        ffn_kernel,
        out_shape=jax.ShapeDtypeStruct((mp, P), x.dtype),
        grid_spec=pltpu.PrefetchScalarGridSpec(
            num_scalar_prefetch=0,
            grid=grid,
            in_specs=[
                pl.BlockSpec((tile_mp, lanes), lambda i: (i, 0)),    # packed x tile
                pl.BlockSpec((lanes, P * H), lambda i: (0, 0)),      # kron(I, W1^T)
                pl.BlockSpec((1, P * H), lambda i: (0, 0)),          # tiled b1
                pl.BlockSpec((P * H, P), lambda i: (0, 0)),          # kron(I, w2 col)
                pl.BlockSpec(memory_space=pltpu.MemorySpace.SMEM),   # b2 scalar
            ],
            out_specs=pl.BlockSpec((tile_mp, P), lambda i: (i, 0)),  # packed y tile
        ),
        compiler_params=pltpu.CompilerParams(
            dimension_semantics=("parallel",),
            vmem_limit_bytes=48 * 1024 * 1024,
        ),
    )(x_packed, w1_big, b1_big, w2_big, b2_s)

    out = out.reshape(m_pack)[:M]            # unpack rows; drop padding
    return out.reshape(orig_shape[:-1] + (1,))


def xavier_uniform(key, out_features, in_features, dtype=jnp.float32):
    # matches torch.nn.init.xavier_uniform_ (gain=1)
    limit = math.sqrt(6.0 / (in_features + out_features))
    return jax.random.uniform(key, (out_features, in_features),
                              minval=-limit, maxval=limit, dtype=dtype)


if __name__ == "__main__":
    # Small shapes consistent with the module: batch=2, seq=8, freq_len=16, hidden=32
    B, S, FREQ_LEN, HIDDEN = 2, 8, 16, 32

    key = jax.random.PRNGKey(0)
    kx, kw1, kw2 = jax.random.split(key, 3)

    x = jax.random.normal(kx, (B, S, FREQ_LEN), dtype=jnp.float32)

    # Deterministic parameter init (Xavier uniform weights, zero biases)
    w1 = xavier_uniform(kw1, HIDDEN, FREQ_LEN)   # (hidden, freq_len)
    b1 = jnp.zeros((HIDDEN,), jnp.float32)
    w2 = xavier_uniform(kw2, 1, HIDDEN)          # (1, hidden)
    b2 = jnp.zeros((1,), jnp.float32)

    out = feed_forward_network(x, w1, b1, w2, b2)
    out = jax.block_until_ready(out)

    # Reference check in plain JAX (eval-mode dropout == identity)
    ref = jnp.maximum(x @ w1.T + b1, 0.0) @ w2.T + b2
    assert out.shape == (B, S, 1), out.shape
    assert jnp.allclose(out, ref, atol=1e-5, rtol=1e-5), "mismatch vs reference"

    print("KERNEL_OK")
</pallas_src>

<mosaic_0001>
module attributes {stable_mosaic.version = 11 : i64} {
  func.func @ffn_kernel(%arg0: i32, %arg1: memref<2x128xf32, #tpu.memory_space<vmem>>, %arg2: memref<128x256xf32, #tpu.memory_space<vmem>>, %arg3: memref<1x256xf32, #tpu.memory_space<vmem>>, %arg4: memref<256x8xf32, #tpu.memory_space<vmem>>, %arg5: memref<1x1xf32, #tpu.memory_space<smem>>, %arg6: memref<2x8xf32, #tpu.memory_space<vmem>>) attributes {dimension_semantics = [#tpu.dimension_semantics<parallel>], iteration_bounds = array<i64: 1>, scalar_prefetch = 0 : i64, scratch_operands = 0 : i64, tpu.core_type = #tpu.core_type<tc>, window_params = [{transform_indices = @transform_0, window_bounds = array<i64: 2, 128>}, {pipeline_mode = #tpu.pipeline_mode<synchronous>, transform_indices = @transform_1, window_bounds = array<i64: 128, 256>}, {pipeline_mode = #tpu.pipeline_mode<synchronous>, transform_indices = @transform_2, window_bounds = array<i64: 1, 256>}, {pipeline_mode = #tpu.pipeline_mode<synchronous>, transform_indices = @transform_3, window_bounds = array<i64: 256, 8>}, {transform_indices = @transform_4, window_bounds = array<i64: 1, 1>}, {transform_indices = @transform_5, window_bounds = array<i64: 2, 8>}]} {
    %c0 = arith.constant 0 : index
    %c0_0 = arith.constant 0 : index
    %0 = vector.load %arg1[%c0, %c0_0] : memref<2x128xf32, #tpu.memory_space<vmem>>, vector<2x128xf32>
    %c0_1 = arith.constant 0 : index
    %c0_2 = arith.constant 0 : index
    %1 = vector.load %arg2[%c0_1, %c0_2] : memref<128x256xf32, #tpu.memory_space<vmem>>, vector<128x256xf32>
    %cst = arith.constant dense<0.000000e+00> : vector<2x256xf32>
    %2 = tpu.matmul %0, %1, %cst {dimension_numbers = #tpu.dot_dimension_numbers<[1], [0], [0], [1], [0, 0, 1, 1], [], []>} : vector<2x128xf32>, vector<128x256xf32>, vector<2x256xf32> -> vector<2x256xf32>
    %c0_3 = arith.constant 0 : index
    %c0_4 = arith.constant 0 : index
    %3 = vector.load %arg3[%c0_3, %c0_4] : memref<1x256xf32, #tpu.memory_space<vmem>>, vector<1x256xf32>
    %4 = vector.broadcast %3 : vector<1x256xf32> to vector<2x256xf32>
    %5 = arith.addf %2, %4 : vector<2x256xf32>
    %cst_5 = arith.constant 0.000000e+00 : f32
    %6 = vector.broadcast %cst_5 : f32 to vector<2x256xf32>
    %7 = arith.maximumf %5, %6 : vector<2x256xf32>
    %c0_6 = arith.constant 0 : index
    %c0_7 = arith.constant 0 : index
    %8 = vector.load %arg4[%c0_6, %c0_7] : memref<256x8xf32, #tpu.memory_space<vmem>>, vector<256x8xf32>
    %cst_8 = arith.constant dense<0.000000e+00> : vector<2x8xf32>
    %9 = tpu.matmul %7, %8, %cst_8 {dimension_numbers = #tpu.dot_dimension_numbers<[1], [0], [0], [1], [0, 0, 1, 1], [], []>} : vector<2x256xf32>, vector<256x8xf32>, vector<2x8xf32> -> vector<2x8xf32>
    %c0_9 = arith.constant 0 : index
    %c0_10 = arith.constant 0 : index
    %10 = memref.load %arg5[%c0_9, %c0_10] : memref<1x1xf32, #tpu.memory_space<smem>>
    %11 = vector.broadcast %10 : f32 to vector<2x8xf32>
    %12 = arith.addf %9, %11 : vector<2x8xf32>
    %c0_11 = arith.constant 0 : index
    %c0_12 = arith.constant 0 : index
    %13 = vector.load %arg6[%c0_11, %c0_12] : memref<2x8xf32, #tpu.memory_space<vmem>>, vector<2x8xf32>
    tpu.vector_store %arg6[%c0_11, %c0_12], %12 {strides = array<i32>} : memref<2x8xf32, #tpu.memory_space<vmem>>, vector<2x8xf32>,
    return
  }
  func.func @transform_0(%arg0: i32) -> (i32, i32) {
    %c0_i32 = arith.constant 0 : i32
    %c0_i32_0 = arith.constant 0 : i32
    return %arg0, %c0_i32 : i32, i32
  }
  func.func @transform_1(%arg0: i32) -> (i32, i32) {
    %c0_i32 = arith.constant 0 : i32
    %c0_i32_0 = arith.constant 0 : i32
    %c0_i32_1 = arith.constant 0 : i32
    return %c0_i32, %c0_i32_0 : i32, i32
  }
  func.func @transform_2(%arg0: i32) -> (i32, i32) {
    %c0_i32 = arith.constant 0 : i32
    %c0_i32_0 = arith.constant 0 : i32
    %c0_i32_1 = arith.constant 0 : i32
    return %c0_i32, %c0_i32_0 : i32, i32
  }
  func.func @transform_3(%arg0: i32) -> (i32, i32) {
    %c0_i32 = arith.constant 0 : i32
    %c0_i32_0 = arith.constant 0 : i32
    %c0_i32_1 = arith.constant 0 : i32
    return %c0_i32, %c0_i32_0 : i32, i32
  }
  func.func @transform_4(%arg0: i32) -> (i32, i32) {
    %c0_i32 = arith.constant 0 : i32
    %c0_i32_0 = arith.constant 0 : i32
    %c0_i32_1 = arith.constant 0 : i32
    return %c0_i32, %c0_i32_0 : i32, i32
  }
  func.func @transform_5(%arg0: i32) -> (i32, i32) {
    %c0_i32 = arith.constant 0 : i32
    %c0_i32_0 = arith.constant 0 : i32
    return %arg0, %c0_i32 : i32, i32
  }
}

</mosaic_0001>

<llo_original>
// kernel: tpu_custom_call.1
$region0: #{tpu_custom_call.1}
  #allocation0 [shape = 'u32[]', space=smem, size = 0x4, offset = 0x4, fixed_abs, tag = 'smem constant byte address 0x4 - core index']
  #allocation1 [shape = 'u32[144,128]{1,0:T(1,128)}', space=vmem, size = 0x12000, scoped, tag = 'internal scratch']
  #allocation2 [shape = 'f32[1,1]{1,0:T(1,128)S(6)}', space=smem, size = 0x200, scoped, tag = 'scoped memory for tpu_custom_call.1']
  %s0 = inlined_call_operand.vmem [shape: f32[2,128], index: 0, kind: input, shape index: {}]
  %s1 = inlined_call_operand.vmem [shape: f32[128,256], index: 1, kind: input, shape index: {}]
  %s2 = inlined_call_operand.vmem [shape: f32[1,256], index: 2, kind: input, shape index: {}]
  %s3 = inlined_call_operand.vmem [shape: f32[256,8], index: 3, kind: input, shape index: {}]
  %s4 = inlined_call_operand.<no memory space> [shape: f32[1,1], index: 4, kind: input, shape index: {}]
  %s5 = inlined_call_operand.hbm [shape: f32[2,8], index: 5, kind: output, shape index: {}]
  %s6 = sld [smem:[#allocation0]]
  $region30: #{tpu_custom_call.1} parent=0
    _
  %s8 = ssub.s32 1, %s6
  %s9 = scalar_select 0, %s8, %s6
  %10 = sst [smem:[#allocation2]] %s4
  $region1: #{tpu_custom_call.1} parent=0
    #allocation3 [shape = 'u8[1024]{0}', space=vmem, size = 0x400, scoped, tag = 'output window, operand 0, single buffered']
    #allocation4 [shape = 's32[1]{0}', space=sflag, size = 0x4, scoped, tag = 'scoped memory for tpu_custom_call.1']
    %11 = vsyncpa [#allocation4], 0
    // Predicated region
    $region2: #{tpu_custom_call.1} parent=1 // pred_check
      _
    $region3: #{tpu_custom_call.1} parent=1 // pred_check_branch
      %13 = sbr.rel (0) target = $region5
    $region4: #{tpu_custom_call.1} parent=1 // pred_region
      _
    $region5: #{tpu_custom_call.1} parent=1 // pred_fallthru
      _
    // Predicated region
    $region6: #{tpu_custom_call.1} parent=1 // pred_check
      _
    $region7: #{tpu_custom_call.1} parent=1 // pred_check_branch
      %15 = sbr.rel (0) target = $region9
    $region8: #{tpu_custom_call.1} parent=1 // pred_region
      _
    $region9: #{tpu_custom_call.1} parent=1 // pred_fallthru
      _
    // Predicated region
    $region10: #{tpu_custom_call.1} parent=1 // pred_check
      _
    $region11: #{tpu_custom_call.1} parent=1 // pred_check_branch
      %17 = sbr.rel (0) target = $region13
    $region12: #{tpu_custom_call.1} parent=1 // pred_region
      _
    $region13: #{tpu_custom_call.1} parent=1 // pred_fallthru
      _
    // Predicated region
    $region14: #{tpu_custom_call.1} parent=1 // pred_check
      _
    $region15: #{tpu_custom_call.1} parent=1 // pred_check_branch
      %19 = sbr.rel (0) target = $region17
    $region16: #{tpu_custom_call.1} parent=1 // pred_region
      _
    $region17: #{tpu_custom_call.1} parent=1 // pred_fallthru
      _
    // Predicated region
    $region18: #{tpu_custom_call.1} parent=1 // pred_check
      _
    $region19: #{tpu_custom_call.1} parent=1 // pred_check_branch
      %21 = sbr.rel (0) target = $region21
    $region20: #{tpu_custom_call.1} parent=1 // pred_region
      _
    $region21: #{tpu_custom_call.1} parent=1 // pred_fallthru
      _
    %v22 = vld [vmem:[%s0] sm:$0x3]
    %v23 = vld [vmem:[%s1] sm:$0xff]
    %v24 = vld [vmem:[%s1 + $0x8] sm:$0xff]
    %v25 = vld [vmem:[%s1 + $0x10] sm:$0xff]
    %v26 = vld [vmem:[%s1 + $0x18] sm:$0xff]
    %v27 = vld [vmem:[%s1 + $0x20] sm:$0xff]
    %v28 = vld [vmem:[%s1 + $0x28] sm:$0xff]
    %v29 = vld [vmem:[%s1 + $0x30] sm:$0xff]
    %v30 = vld [vmem:[%s1 + $0x38] sm:$0xff]
    %v31 = vld [vmem:[%s1 + $0x40] sm:$0xff]
    %v32 = vld [vmem:[%s1 + $0x48] sm:$0xff]
    %v33 = vld [vmem:[%s1 + $0x50] sm:$0xff]
    %v34 = vld [vmem:[%s1 + $0x58] sm:$0xff]
    %v35 = vld [vmem:[%s1 + $0x60] sm:$0xff]
    %v36 = vld [vmem:[%s1 + $0x68] sm:$0xff]
    %v37 = vld [vmem:[%s1 + $0x70] sm:$0xff]
    %v38 = vld [vmem:[%s1 + $0x78] sm:$0xff]
    %v39 = vld [vmem:[%s1 + $0x80] sm:$0xff]
    %v40 = vld [vmem:[%s1 + $0x88] sm:$0xff]
    %v41 = vld [vmem:[%s1 + $0x90] sm:$0xff]
    %v42 = vld [vmem:[%s1 + $0x98] sm:$0xff]
    %v43 = vld [vmem:[%s1 + $0xa0] sm:$0xff]
    %v44 = vld [vmem:[%s1 + $0xa8] sm:$0xff]
    %v45 = vld [vmem:[%s1 + $0xb0] sm:$0xff]
    %v46 = vld [vmem:[%s1 + $0xb8] sm:$0xff]
    %v47 = vld [vmem:[%s1 + $0xc0] sm:$0xff]
    %v48 = vld [vmem:[%s1 + $0xc8] sm:$0xff]
    %v49 = vld [vmem:[%s1 + $0xd0] sm:$0xff]
    %v50 = vld [vmem:[%s1 + $0xd8] sm:$0xff]
    %v51 = vld [vmem:[%s1 + $0xe0] sm:$0xff]
    %v52 = vld [vmem:[%s1 + $0xe8] sm:$0xff]
    %v53 = vld [vmem:[%s1 + $0xf0] sm:$0xff]
    %v54 = vld [vmem:[%s1 + $0xf8] sm:$0xff]
    %v55 = vld [vmem:[%s2] sm:$0x3]
    %v57 = vlaneseq
    %v58 = vshrl.u32 %v57, 7
    %v59 = vsub.s32 0, %v58
    %v60 = vrot.slane %v55, %v59
    %v61 = vlaneseq
    %v62 = vshrl.u32 %v61, 7
    %v63 = vsub.s32 1, %v62
    %v64 = vrot.slane %v55, %v63
    %67 = vmatprep.subr.mxu0 %v24
    %68 = vmatpush1.msra.mxu0 %v23
    %69 = vmatprep.subr.mxu0 %v26
    %70 = vmatpush1.msra.mxu0 %v25
    %71 = vmatprep.subr.mxu0 %v28
    %72 = vmatpush1.msra.mxu0 %v27
    %73 = vmatprep.subr.mxu0 %v30
    %74 = vmatpush1.msra.mxu0 %v29
    %75 = vmatprep.subr.mxu0 %v32
    %76 = vmatpush1.msra.mxu0 %v31
    %77 = vmatprep.subr.mxu0 %v34
    %78 = vmatpush1.msra.mxu0 %v33
    %79 = vmatprep.subr.mxu0 %v36
    %80 = vmatpush1.msra.mxu0 %v35
    %81 = vmatprep.subr.mxu0 %v38
    %82 = vmatpush1.msra.mxu0 %v37
    %83 = vmatprep.subr.mxu0 %v40
    %84 = vmatpush1.msra.mxu0 %v39
    %85 = vmatprep.subr.mxu0 %v42
    %86 = vmatpush1.msra.mxu0 %v41
    %87 = vmatprep.subr.mxu0 %v44
    %88 = vmatpush1.msra.mxu0 %v43
    %89 = vmatprep.subr.mxu0 %v46
    %90 = vmatpush1.msra.mxu0 %v45
    %91 = vmatprep.subr.mxu0 %v48
    %92 = vmatpush1.msra.mxu0 %v47
    %93 = vmatprep.subr.mxu0 %v50
    %94 = vmatpush1.msra.mxu0 %v49
    %95 = vmatprep.subr.mxu0 %v52
    %96 = vmatpush1.msra.mxu0 %v51
    %97 = vmatprep.subr.mxu0 %v54
    %98 = vmatpush1.msra.mxu0 %v53
    %99 = vmatprep.subr.mxu0 0.0
    %100 = vmatpush1.msra.mxu0 0.0
    %101 = vmatprep.subr.mxu0 0.0
    %102 = vmatpush1.msra.mxu0 0.0
    %103 = vmatprep.subr.mxu0 0.0
    %104 = vmatpush1.msra.mxu0 0.0
    %105 = vmatprep.subr.mxu0 0.0
    %106 = vmatpush1.msra.mxu0 0.0
    %107 = vmatprep.subr.mxu0 0.0
    %108 = vmatpush1.msra.mxu0 0.0
    %109 = vmatprep.subr.mxu0 0.0
    %110 = vmatpush1.msra.mxu0 0.0
    %111 = vmatprep.subr.mxu0 0.0
    %112 = vmatpush1.msra.mxu0 0.0
    %113 = vmatprep.subr.mxu0 0.0
    %114 = vmatpush1.msra.mxu0 0.0
    %115 = vmatprep.subr.mxu0 0.0
    %116 = vmatpush1.msra.mxu0 0.0
    %117 = vmatprep.subr.mxu0 0.0
    %118 = vmatpush1.msra.mxu0 0.0
    %119 = vmatprep.subr.mxu0 0.0
    %120 = vmatpush1.msra.mxu0 0.0
    %121 = vmatprep.subr.mxu0 0.0
    %122 = vmatpush1.msra.mxu0 0.0
    %123 = vmatprep.subr.mxu0 0.0
    %124 = vmatpush1.msra.mxu0 0.0
    %125 = vmatprep.subr.mxu0 0.0
    %126 = vmatpush1.msra.mxu0 0.0
    %127 = vmatprep.subr.mxu0 0.0
    %128 = vmatpush1.msra.mxu0 0.0
    %129 = vmatprep.subr.mxu0 0.0
    %130 = vmatpush1.msra.mxu0 0.0
    %131 = vmatprep.mubr.f32.mxu0 0.0
    %132 = vmatmul.mubr.f32.gmra.mrb[0].mxu0 %v22
    %v133 = vpop.f32.mrb[0].mxu0
    %v134 = vadd.f32 %v60, %v133
    %v135 = vpop.f32.mrb[0].mxu0
    %v136 = vadd.f32 %v64, %v135
    %137 = vdwg.mxu0
    %v138 = vmax.f32 %v134, 0.0
    %v139 = vmax.f32 %v136, 0.0
    %v140 = vld [vmem:[%s3] sm:$0xff]
    %v141 = vld [vmem:[%s3 + $0x8] sm:$0xff]
    %v142 = vld [vmem:[%s3 + $0x10] sm:$0xff]
    %v143 = vld [vmem:[%s3 + $0x18] sm:$0xff]
    %v144 = vld [vmem:[%s3 + $0x20] sm:$0xff]
    %v145 = vld [vmem:[%s3 + $0x28] sm:$0xff]
    %v146 = vld [vmem:[%s3 + $0x30] sm:$0xff]
    %v147 = vld [vmem:[%s3 + $0x38] sm:$0xff]
    %v148 = vld [vmem:[%s3 + $0x40] sm:$0xff]
    %v149 = vld [vmem:[%s3 + $0x48] sm:$0xff]
    %v150 = vld [vmem:[%s3 + $0x50] sm:$0xff]
    %v151 = vld [vmem:[%s3 + $0x58] sm:$0xff]
    %v152 = vld [vmem:[%s3 + $0x60] sm:$0xff]
    %v153 = vld [vmem:[%s3 + $0x68] sm:$0xff]
    %v154 = vld [vmem:[%s3 + $0x70] sm:$0xff]
    %v155 = vld [vmem:[%s3 + $0x78] sm:$0xff]
    %v156 = vld [vmem:[%s3 + $0x80] sm:$0xff]
    %v157 = vld [vmem:[%s3 + $0x88] sm:$0xff]
    %v158 = vld [vmem:[%s3 + $0x90] sm:$0xff]
    %v159 = vld [vmem:[%s3 + $0x98] sm:$0xff]
    %v160 = vld [vmem:[%s3 + $0xa0] sm:$0xff]
    %v161 = vld [vmem:[%s3 + $0xa8] sm:$0xff]
    %v162 = vld [vmem:[%s3 + $0xb0] sm:$0xff]
    %v163 = vld [vmem:[%s3 + $0xb8] sm:$0xff]
    %v164 = vld [vmem:[%s3 + $0xc0] sm:$0xff]
    %v165 = vld [vmem:[%s3 + $0xc8] sm:$0xff]
    %v166 = vld [vmem:[%s3 + $0xd0] sm:$0xff]
    %v167 = vld [vmem:[%s3 + $0xd8] sm:$0xff]
    %v168 = vld [vmem:[%s3 + $0xe0] sm:$0xff]
    %v169 = vld [vmem:[%s3 + $0xe8] sm:$0xff]
    %v170 = vld [vmem:[%s3 + $0xf0] sm:$0xff]
    %v171 = vld [vmem:[%s3 + $0xf8] sm:$0xff]
    %s172 = sld [smem:[#allocation2]]
    %v173 = vstv %s172
    %174 = vmatprep.subr.mxu0 0.0
    %175 = vmatpush1.msra.mxu0 %v140
    %176 = vmatprep.subr.mxu0 0.0
    %177 = vmatpush1.msra.mxu0 %v141
    %178 = vmatprep.subr.mxu0 0.0
    %179 = vmatpush1.msra.mxu0 %v142
    %180 = vmatprep.subr.mxu0 0.0
    %181 = vmatpush1.msra.mxu0 %v143
    %182 = vmatprep.subr.mxu0 0.0
    %183 = vmatpush1.msra.mxu0 %v144
    %184 = vmatprep.subr.mxu0 0.0
    %185 = vmatpush1.msra.mxu0 %v145
    %186 = vmatprep.subr.mxu0 0.0
    %187 = vmatpush1.msra.mxu0 %v146
    %188 = vmatprep.subr.mxu0 0.0
    %189 = vmatpush1.msra.mxu0 %v147
    %190 = vmatprep.subr.mxu0 0.0
    %191 = vmatpush1.msra.mxu0 %v148
    %192 = vmatprep.subr.mxu0 0.0
    %193 = vmatpush1.msra.mxu0 %v149
    %194 = vmatprep.subr.mxu0 0.0
    %195 = vmatpush1.msra.mxu0 %v150
    %196 = vmatprep.subr.mxu0 0.0
    %197 = vmatpush1.msra.mxu0 %v151
    %198 = vmatprep.subr.mxu0 0.0
    %199 = vmatpush1.msra.mxu0 %v152
    %200 = vmatprep.subr.mxu0 0.0
    %201 = vmatpush1.msra.mxu0 %v153
    %202 = vmatprep.subr.mxu0 0.0
    %203 = vmatpush1.msra.mxu0 %v154
    %204 = vmatprep.subr.mxu0 0.0
    %205 = vmatpush1.msra.mxu0 %v155
    %206 = vmatprep.subr.mxu0 0.0
    %207 = vmatpush1.msra.mxu0 %v156
    %208 = vmatprep.subr.mxu0 0.0
    %209 = vmatpush1.msra.mxu0 %v157
    %210 = vmatprep.subr.mxu0 0.0
    %211 = vmatpush1.msra.mxu0 %v158
    %212 = vmatprep.subr.mxu0 0.0
    %213 = vmatpush1.msra.mxu0 %v159
    %214 = vmatprep.subr.mxu0 0.0
    %215 = vmatpush1.msra.mxu0 %v160
    %216 = vmatprep.subr.mxu0 0.0
    %217 = vmatpush1.msra.mxu0 %v161
    %218 = vmatprep.subr.mxu0 0.0
    %219 = vmatpush1.msra.mxu0 %v162
    %220 = vmatprep.subr.mxu0 0.0
    %221 = vmatpush1.msra.mxu0 %v163
    %222 = vmatprep.subr.mxu0 0.0
    %223 = vmatpush1.msra.mxu0 %v164
    %224 = vmatprep.subr.mxu0 0.0
    %225 = vmatpush1.msra.mxu0 %v165
    %226 = vmatprep.subr.mxu0 0.0
    %227 = vmatpush1.msra.mxu0 %v166
    %228 = vmatprep.subr.mxu0 0.0
    %229 = vmatpush1.msra.mxu0 %v167
    %230 = vmatprep.subr.mxu0 0.0
    %231 = vmatpush1.msra.mxu0 %v168
    %232 = vmatprep.subr.mxu0 0.0
    %233 = vmatpush1.msra.mxu0 %v169
    %234 = vmatprep.subr.mxu0 0.0
    %235 = vmatpush1.msra.mxu0 %v170
    %236 = vmatprep.subr.mxu0 0.0
    %237 = vmatpush1.msra.mxu0 %v171
    %238 = vmatprep.mubr.f32.mxu0 %v139
    %239 = vmatmul.mubr.f32.gmra.mrb[0].mxu0 %v138
    %v240 = vpop.f32.mrb[0].mxu0
    %v241 = vadd.f32 %v173, %v240
    %v242 = vpop.f32.mrb[0].mxu0
    %243 = vdwg.mxu0
    %vm244 = vcmask 58368
    %245 = vst.msk [vmem:[#allocation3] sm:$0x3] %vm244, %v241
    // Predicated region
    $region22: #{tpu_custom_call.1} parent=1 // pred_check
      _
    $region23: #{tpu_custom_call.1} parent=1 // pred_check_branch
      %247 = sbr.rel (0) target = $region25
    $region24: #{tpu_custom_call.1} parent=1 // pred_region
      %s249 = ssub.s32 32, 32
      %250 = vsyncadd [#allocation4], %s249
      %s252 = sshll.u32 [#allocation3], 4
      %s253 = int_to_ptr.vmem [resolvable:$true] %s252
      %255 = dma.vmem_to_hbm [thread:$0]  %s253, 32, %s5, [#allocation4]
    $region25: #{tpu_custom_call.1} parent=1 // pred_fallthru
      _
    // Predicated region
    $region26: #{tpu_custom_call.1} parent=1 // pred_check
      _
    $region27: #{tpu_custom_call.1} parent=1 // pred_check_branch
      %257 = sbr.rel (0) target = $region29
    $region28: #{tpu_custom_call.1} parent=1 // pred_region
      %258 = dma.done [#allocation4], 32
    $region29: #{tpu_custom_call.1} parent=1 // pred_fallthru
      _
    %259 = vsyncpa [#allocation4], 1

</llo_original>
